<compile_context>
chip_gen: v5e
topology: v5e:2x2
jax: 0.10.0
libtpu: 0.0.40
codegen_flags: <defaults>
</compile_context>

<pallas_src>
import functools
import math

import jax
import jax.numpy as jnp
from jax import lax
from jax.experimental import pallas as pl
from jax.experimental.pallas import tpu as pltpu

_LANE = 128
_SUBLANE = 8
_MAX_COL_BLK = 8192  # bounds the in-kernel lane-group reduce unroll to <= 64


def _floor_lane(x):
    return (x // _LANE) * _LANE


def _ceil_lane(x):
    return ((x + _LANE - 1) // _LANE) * _LANE


def _cdiv(a, b):
    return -(-a // b)


def _vmem_budget():
    """(vmem_limit_bytes, per-input-tile byte target), generation aware."""
    cap = None
    try:
        cap = getattr(pltpu.get_tpu_info(), "vmem_capacity_bytes", None)
    except Exception:
        cap = None
    if cap is None:
        cap = 64 * 1024 * 1024  # conservative (v7x-sized) fallback
    if cap >= 96 * 1024 * 1024:  # v5e / v6e: 128 MiB physical VMEM
        return 64 * 1024 * 1024, 8 * 1024 * 1024
    # v7x: 64 MiB physical VMEM per TensorCore
    return 40 * 1024 * 1024, 4 * 1024 * 1024


def _choose_blocks(B, C, W, col_start, itemsize, tile_bytes):
    """Pick (row_blk, col_blk, need_start_mask) for the flattened (B, C) view."""
    # Column block: multiple of 128 (or full C), sized to the byte budget,
    # no wider than the window, and preferably dividing col_start so the first
    # window block starts exactly at the window (no overfetch / start mask).
    min_rows = min(B, _SUBLANE)
    budget_cols = max(_LANE, tile_bytes // max(1, min_rows * itemsize))
    upper = min(_floor_lane(C), _floor_lane(budget_cols), _ceil_lane(W), _MAX_COL_BLK)
    if upper < _LANE:
        col_blk = C  # tiny last dim: take full rows (full-dim block is legal)
        need_start_mask = col_start > 0
    else:
        col_blk = upper
        need_start_mask = (col_start % col_blk) != 0
        if need_start_mask:
            # Look for a 128-multiple divisor of col_start in [upper/2, upper].
            cb = upper - _LANE
            while cb >= max(_LANE, upper // 2):
                if col_start % cb == 0:
                    col_blk = cb
                    need_start_mask = False
                    break
                cb -= _LANE

    # Row block: fill the remaining byte budget (multiple of 32, or full B).
    rows_budget = max(1, tile_bytes // (col_blk * itemsize))
    if B <= rows_budget or B <= _SUBLANE:
        row_blk = B
    else:
        row_blk = max(32, (rows_budget // 32) * 32)
        row_blk = min(row_blk, B)
    return row_blk, col_blk, need_start_mask


def _mse_window_kernel(pred_ref, targ_ref, out_ref, acc_ref, *,
                       n_rows, total_cols, col_start, col_block0,
                       nc, nc_per_split,
                       need_start_mask, need_end_mask, need_row_mask,
                       may_overhang):
    """Accumulate sum((pred - target)^2) over the last-n window.

    pred_ref / targ_ref : (row_blk, col_blk) VMEM tiles of the (B, T*F) view.
    out_ref             : (1, 1, 8, 128) partial-sum block per (batch blk, half).
    acc_ref             : (row_blk, acc_cols) f32 narrow accumulator scratch.
    """
    i = pl.program_id(0)   # batch block   ("parallel")
    h = pl.program_id(1)   # column half   ("parallel", v7x megacore split)
    j = pl.program_id(2)   # column block  ("arbitrary", reduction)
    row_blk, col_blk = pred_ref.shape
    acc_cols = acc_ref.shape[1]

    wb = h * nc_per_split + j      # column-block index within the window
    cb = col_block0 + wb           # column-block index within (B, C)

    @pl.when(j == 0)
    def _():
        acc_ref[...] = jnp.zeros_like(acc_ref)

    def accumulate(masked):
        p = pred_ref[...].astype(jnp.float32)
        t = targ_ref[...].astype(jnp.float32)
        d = p - t
        sq = d * d                                   # VPU elementwise
        if masked:
            # 1-D iotas; the compares broadcast (no full int32 index planes).
            col_g = cb * col_blk + lax.broadcasted_iota(jnp.int32, (1, col_blk), 1)
            row_g = i * row_blk + lax.broadcasted_iota(jnp.int32, (row_blk, 1), 0)
            valid = (col_g >= col_start) & (col_g < total_cols) & (row_g < n_rows)
            sq = jnp.where(valid, sq, 0.0)
        # Lane-group tree reduce (row_blk, col_blk) -> (row_blk, acc_cols):
        # static 128-aligned slices + VPU adds; keeps the accumulator RMW tiny.
        if col_blk == acc_cols:
            part = sq
        else:
            chunks = [sq[:, k * acc_cols:(k + 1) * acc_cols]
                      for k in range(col_blk // acc_cols)]
            while len(chunks) > 1:
                nxt = [a + b for a, b in zip(chunks[0::2], chunks[1::2])]
                if len(chunks) % 2:
                    nxt.append(chunks[-1])
                chunks = nxt
            part = chunks[0]
        acc_ref[...] += part

    # Static edge analysis: interior blocks skip the mask path entirely.
    edge_conds = []
    if need_start_mask:
        edge_conds.append(wb == 0)
    if need_end_mask:
        edge_conds.append(wb == nc - 1)
    if need_row_mask:
        edge_conds.append(i == pl.num_programs(0) - 1)

    work = (wb < nc) if may_overhang else None   # skip overhang blocks of half 1

    if not edge_conds:
        if work is None:
            accumulate(False)
        else:
            pl.when(work)(lambda: accumulate(False))
    else:
        is_edge = functools.reduce(jnp.logical_or, edge_conds)
        fast = jnp.logical_not(is_edge)
        slow = is_edge
        if work is not None:
            fast = jnp.logical_and(fast, work)
            slow = jnp.logical_and(slow, work)
        pl.when(fast)(lambda: accumulate(False))
        pl.when(slow)(lambda: accumulate(True))

    @pl.when(j == pl.num_programs(2) - 1)
    def _():
        # Single cross-lane (XLU) reduce per (batch block, column half).
        out_ref[...] = jnp.sum(acc_ref[...]) * jnp.ones_like(out_ref)


class BaseLossPallas:
    """JAX/Pallas equivalent of tsfewshot BaseLoss with an MSE `_loss_fn`."""

    def __init__(self, predict_last_n=None, min_pallas_elements=1 << 20):
        # mirrors cfg.predict_last_n; problems smaller than min_pallas_elements
        # dispatch to plain jnp (XLA fuses slice+reduce; kernel launch overhead
        # dominates at KB scale).
        self._predict_last_n = predict_last_n
        self._min_pallas_elements = min_pallas_elements

    def __call__(self, prediction: jnp.ndarray, target: jnp.ndarray) -> jnp.ndarray:
        assert prediction.shape == target.shape
        assert prediction.ndim >= 2
        B, T = prediction.shape[:2]
        F = int(math.prod(prediction.shape[2:]))  # 1 if ndim == 2
        n = T if self._predict_last_n is None else int(self._predict_last_n)
        assert 0 < n <= T

        if B * n * F < self._min_pallas_elements:
            pw = prediction[:, T - n:].astype(jnp.float32)
            tw = target[:, T - n:].astype(jnp.float32)
            return jnp.mean((pw - tw) ** 2)

        # Free, layout-preserving reshape: features fold into a lane-dense last
        # dim; the last-n window becomes the trailing n*F columns.
        C = T * F
        W = n * F
        col_start = C - W
        pred2d = prediction.reshape(B, C)
        targ2d = target.reshape(B, C)

        itemsize = jnp.dtype(prediction.dtype).itemsize
        vmem_limit, tile_bytes = _vmem_budget()
        row_blk, col_blk, need_start_mask = _choose_blocks(
            B, C, W, col_start, itemsize, tile_bytes)

        col_block0 = col_start // col_blk
        total_col_blocks = _cdiv(C, col_blk)
        nc = total_col_blocks - col_block0           # window column blocks
        nb = _cdiv(B, row_blk)
        need_end_mask = (C % col_blk) != 0
        need_row_mask = (B % row_blk) != 0

        # Split the window columns into two "parallel" halves so both v7x
        # TensorCores get work when the batch fits a single row block.
        n_splits = 2 if (nb == 1 and nc >= 2) else 1
        nc_per_split = _cdiv(nc, n_splits)
        may_overhang = n_splits * nc_per_split > nc

        acc_cols = _LANE if (col_blk % _LANE == 0) else col_blk
        last_col_block = total_col_blocks - 1

        def in_index_map(i, h, j):
            cb = col_block0 + h * nc_per_split + j
            return (i, jnp.minimum(cb, last_col_block))  # clamp overhang blocks

        kernel = functools.partial(
            _mse_window_kernel,
            n_rows=B, total_cols=C, col_start=col_start, col_block0=col_block0,
            nc=nc, nc_per_split=nc_per_split,
            need_start_mask=need_start_mask, need_end_mask=need_end_mask,
            need_row_mask=need_row_mask, may_overhang=may_overhang)

        cost = pl.CostEstimate(
            flops=3 * B * W,
            transcendentals=0,
            bytes_accessed=2 * B * W * itemsize + nb * n_splits * 8 * 128 * 4)

        partials = pl.pallas_call(
            kernel,
            out_shape=jax.ShapeDtypeStruct((nb, n_splits, 8, 128), jnp.float32),
            grid=(nb, n_splits, nc_per_split),
            in_specs=[
                pl.BlockSpec((row_blk, col_blk), in_index_map),
                pl.BlockSpec((row_blk, col_blk), in_index_map),
            ],
            # One (8,128)-aligned partial block per (batch block, half) -> no
            # cross-core write races under megacore sharding.
            out_specs=pl.BlockSpec((1, 1, 8, 128), lambda i, h, j: (i, h, 0, 0)),
            scratch_shapes=[pltpu.VMEM((row_blk, acc_cols), jnp.float32)],
            compiler_params=pltpu.CompilerParams(
                dimension_semantics=("parallel", "parallel", "arbitrary"),
                vmem_limit_bytes=vmem_limit),
            cost_estimate=cost,
        )(pred2d, targ2d)

        count = jnp.float32(B * n * F)
        return jnp.sum(partials[:, :, 0, 0]) / count


if __name__ == "__main__":
    key = jax.random.PRNGKey(0)
    k1, k2, k3, k4 = jax.random.split(key, 4)

    # Small shapes consistent with a time-series loss: (batch=2, seq=8, features=32).
    B, T, F = 2, 8, 32
    prediction = jax.random.normal(k1, (B, T, F), dtype=jnp.float32)
    target = jax.random.normal(k2, (B, T, F), dtype=jnp.float32)

    predict_last_n = 4
    # min_pallas_elements=0 forces the Pallas path at these tiny test sizes
    # (the production default dispatches small losses to fused XLA instead).
    loss = jax.block_until_ready(
        BaseLossPallas(predict_last_n, min_pallas_elements=0)(prediction, target))
    ref = jnp.mean(
        (prediction[:, -predict_last_n:] - target[:, -predict_last_n:]) ** 2)
    assert jnp.allclose(loss, ref, rtol=1e-5, atol=1e-5), (loss, ref)

    # predict_last_n=None path (all time steps), same as the PyTorch module.
    loss_all = jax.block_until_ready(
        BaseLossPallas(None, min_pallas_elements=0)(prediction, target))
    ref_all = jnp.mean((prediction - target) ** 2)
    assert jnp.allclose(loss_all, ref_all, rtol=1e-5, atol=1e-5), (loss_all, ref_all)

    # Ragged case exercising the edge-mask + two-way column-split code paths.
    B2, T2, F2, n2 = 1, 300, 17, 123
    p2 = jax.random.normal(k3, (B2, T2, F2), dtype=jnp.float32)
    t2 = jax.random.normal(k4, (B2, T2, F2), dtype=jnp.float32)
    loss2 = jax.block_until_ready(
        BaseLossPallas(n2, min_pallas_elements=0)(p2, t2))
    ref2 = jnp.mean((p2[:, -n2:] - t2[:, -n2:]) ** 2)
    assert jnp.allclose(loss2, ref2, rtol=1e-5, atol=1e-5), (loss2, ref2)

    print("KERNEL_OK")
</pallas_src>

<mosaic_0001>
module attributes {stable_mosaic.version = 11 : i64} {
  func.func @_mse_window_kernel(%arg0: i32, %arg1: i32, %arg2: i32, %arg3: memref<2x128xf32, #tpu.memory_space<vmem>>, %arg4: memref<2x128xf32, #tpu.memory_space<vmem>>, %arg5: memref<1x1x8x128xf32, #tpu.memory_space<vmem>>, %arg6: memref<2x128xf32, #tpu.memory_space<vmem>>) attributes {dimension_semantics = [#tpu.dimension_semantics<parallel>, #tpu.dimension_semantics<parallel>, #tpu.dimension_semantics<arbitrary>], iteration_bounds = array<i64: 1, 1, 1>, scalar_prefetch = 0 : i64, scratch_operands = 1 : i64, tpu.core_type = #tpu.core_type<tc>, window_params = [{transform_indices = @transform_0, window_bounds = array<i64: 2, 128>}, {transform_indices = @transform_1, window_bounds = array<i64: 2, 128>}, {transform_indices = @transform_2, window_bounds = array<i64: 1, 1, 8, 128>}]} {
    %c0_i32 = arith.constant 0 : i32
    %0 = arith.cmpi eq, %arg2, %c0_i32 : i32
    %1 = arith.extui %0 : i1 to i32
    %c0_i32_0 = arith.constant 0 : i32
    %2 = arith.cmpi ne, %1, %c0_i32_0 : i32
    scf.if %2 {
      %cst = arith.constant 0.000000e+00 : f32
      %13 = vector.broadcast %cst : f32 to vector<2x128xf32>
      %c0_10 = arith.constant 0 : index
      %c0_11 = arith.constant 0 : index
      %14 = vector.load %arg6[%c0_10, %c0_11] : memref<2x128xf32, #tpu.memory_space<vmem>>, vector<2x128xf32>
      tpu.vector_store %arg6[%c0_10, %c0_11], %13 {strides = array<i32>} : memref<2x128xf32, #tpu.memory_space<vmem>>, vector<2x128xf32>,
    } else {
    }
    %c0 = arith.constant 0 : index
    %c0_1 = arith.constant 0 : index
    %3 = vector.load %arg3[%c0, %c0_1] : memref<2x128xf32, #tpu.memory_space<vmem>>, vector<2x128xf32>
    %c0_2 = arith.constant 0 : index
    %c0_3 = arith.constant 0 : index
    %4 = vector.load %arg4[%c0_2, %c0_3] : memref<2x128xf32, #tpu.memory_space<vmem>>, vector<2x128xf32>
    %5 = arith.subf %3, %4 : vector<2x128xf32>
    %6 = arith.mulf %5, %5 : vector<2x128xf32>
    %c0_4 = arith.constant 0 : index
    %c0_5 = arith.constant 0 : index
    %7 = vector.load %arg6[%c0_4, %c0_5] : memref<2x128xf32, #tpu.memory_space<vmem>>, vector<2x128xf32>
    %8 = arith.addf %7, %6 : vector<2x128xf32>
    %c0_6 = arith.constant 0 : index
    %c0_7 = arith.constant 0 : index
    %9 = vector.load %arg6[%c0_6, %c0_7] : memref<2x128xf32, #tpu.memory_space<vmem>>, vector<2x128xf32>
    tpu.vector_store %arg6[%c0_6, %c0_7], %8 {strides = array<i32>} : memref<2x128xf32, #tpu.memory_space<vmem>>, vector<2x128xf32>,
    %c0_i32_8 = arith.constant 0 : i32
    %10 = arith.cmpi eq, %arg2, %c0_i32_8 : i32
    %11 = arith.extui %10 : i1 to i32
    %c0_i32_9 = arith.constant 0 : i32
    %12 = arith.cmpi ne, %11, %c0_i32_9 : i32
    scf.if %12 {
      %c0_10 = arith.constant 0 : index
      %c0_11 = arith.constant 0 : index
      %13 = vector.load %arg6[%c0_10, %c0_11] : memref<2x128xf32, #tpu.memory_space<vmem>>, vector<2x128xf32>
      %14 = vector.shape_cast %13 : vector<2x128xf32> to vector<1x2x128xf32>
      %cst = arith.constant dense<0.000000e+00> : vector<1xf32>
      %15 = vector.multi_reduction <add>, %14, %cst [1, 2] : vector<1x2x128xf32> to vector<1xf32>
      %16 = vector.shape_cast %15 : vector<1xf32> to vector<1x1x1xf32>
      %17 = vector.extract %16[0, 0, 0] : f32 from vector<1x1x1xf32>
      %cst_12 = arith.constant 1.000000e+00 : f32
      %18 = vector.broadcast %cst_12 : f32 to vector<1x1x8x128xf32>
      %19 = vector.broadcast %17 : f32 to vector<1x1x8x128xf32>
      %20 = arith.mulf %19, %18 : vector<1x1x8x128xf32>
      %c0_13 = arith.constant 0 : index
      %c0_14 = arith.constant 0 : index
      %c0_15 = arith.constant 0 : index
      %c0_16 = arith.constant 0 : index
      %21 = vector.load %arg5[%c0_13, %c0_14, %c0_15, %c0_16] : memref<1x1x8x128xf32, #tpu.memory_space<vmem>>, vector<1x1x8x128xf32>
      tpu.vector_store %arg5[%c0_13, %c0_14, %c0_15, %c0_16], %20 {strides = array<i32>} : memref<1x1x8x128xf32, #tpu.memory_space<vmem>>, vector<1x1x8x128xf32>,
    } else {
    }
    return
  }
  func.func @transform_0(%arg0: i32, %arg1: i32, %arg2: i32) -> (i32, i32) {
    %c1_i32 = arith.constant 1 : i32
    %0 = arith.muli %arg1, %c1_i32 : i32
    %c1_i32_0 = arith.constant 1 : i32
    %1 = arith.addi %c1_i32_0, %0 : i32
    %2 = arith.addi %1, %arg2 : i32
    %c1_i32_1 = arith.constant 1 : i32
    %3 = arith.minsi %2, %c1_i32_1 : i32
    %c0_i32 = arith.constant 0 : i32
    return %arg0, %3 : i32, i32
  }
  func.func @transform_1(%arg0: i32, %arg1: i32, %arg2: i32) -> (i32, i32) {
    %c1_i32 = arith.constant 1 : i32
    %0 = arith.muli %arg1, %c1_i32 : i32
    %c1_i32_0 = arith.constant 1 : i32
    %1 = arith.addi %c1_i32_0, %0 : i32
    %2 = arith.addi %1, %arg2 : i32
    %c1_i32_1 = arith.constant 1 : i32
    %3 = arith.minsi %2, %c1_i32_1 : i32
    %c0_i32 = arith.constant 0 : i32
    return %arg0, %3 : i32, i32
  }
  func.func @transform_2(%arg0: i32, %arg1: i32, %arg2: i32) -> (i32, i32, i32, i32) {
    %c0_i32 = arith.constant 0 : i32
    %c0_i32_0 = arith.constant 0 : i32
    %c0_i32_1 = arith.constant 0 : i32
    return %arg0, %arg1, %c0_i32, %c0_i32_0 : i32, i32, i32, i32
  }
}

</mosaic_0001>

<llo_original>
// kernel: tpu_custom_call.1
$region0: #{tpu_custom_call.1}
  #allocation0 [shape = 'u32[]', space=smem, size = 0x4, offset = 0x4, fixed_abs, tag = 'smem constant byte address 0x4 - core index']
  #allocation1 [shape = 'u32[72,128]{1,0:T(1,128)}', space=vmem, size = 0x9000, scoped, tag = 'internal scratch']
  #allocation2 [shape = 'f32[2,128]{1,0:T(2,128)}', space=vmem, size = 0x400, scoped, tag = 'scratch operand']
  %s0 = inlined_call_operand.hbm [shape: f32[2,256], index: 0, kind: input, shape index: {}]
  %s1 = inlined_call_operand.hbm [shape: f32[2,256], index: 1, kind: input, shape index: {}]
  %s2 = inlined_call_operand.hbm [shape: f32[1,1,8,128], index: 2, kind: output, shape index: {}]
  %s3 = sld [smem:[#allocation0]]
  $region34: #{tpu_custom_call.1} parent=0
    _
  %s5 = ssub.s32 1, %s3
  %s6 = scalar_select 0, %s5, %s3
  $region1: #{tpu_custom_call.1} parent=0
    #allocation3 [shape = 'u8[1024]{0}', space=vmem, size = 0x400, scoped, tag = 'input window, operand 0, single buffered']
    #allocation4 [shape = 's32[1]{0}', space=sflag, size = 0x4, scoped, tag = 'scoped memory for tpu_custom_call.1']
    #allocation5 [shape = 's32[1]{0}', space=sflag, size = 0x4, scoped, tag = 'scoped memory for tpu_custom_call.1']
    #allocation6 [shape = 'u8[1024]{0}', space=vmem, size = 0x400, scoped, tag = 'input window, operand 1, single buffered']
    #allocation7 [shape = 's32[1]{0}', space=sflag, size = 0x4, scoped, tag = 'scoped memory for tpu_custom_call.1']
    #allocation8 [shape = 'u8[4096]{0}', space=vmem, size = 0x1000, scoped, tag = 'output window, operand 0, single buffered']
    %7 = vsyncpa [#allocation4], 0
    %8 = vsyncpa [#allocation7], 0
    %9 = vsyncpa [#allocation5], 0
    // Predicated region
    $region2: #{tpu_custom_call.1} parent=1 // pred_check
      _
    $region3: #{tpu_custom_call.1} parent=1 // pred_check_branch
      %11 = sbr.rel (0) target = $region5
    $region4: #{tpu_custom_call.1} parent=1 // pred_region
      %s12 = sadd.s32 0, 1
      %s13 = sadd.s32 %s12, 0
      %p14 = scmp.lt.s32.totalorder %s13, 1
      %s15 = scalar_select %p14, %s13, 1
      %17 = vsyncadd [#allocation4], 0
      %s18 = smul.addr %s15, 2
      %s19 = scalar_lea.hbm %s0, %s18
      %s21 = sshll.u32 %s19, 4
      %s22 = int_to_ptr.hbm [resolvable:$true] %s21
      %s23 = sshll.u32 [#allocation3], 4
      %s24 = int_to_ptr.vmem [resolvable:$true] %s23
      %26 = dma.hbm_to_vmem [thread:$0]  %s22, 32, %s24, [#allocation4]
    $region5: #{tpu_custom_call.1} parent=1 // pred_fallthru
      _
    // Predicated region
    $region6: #{tpu_custom_call.1} parent=1 // pred_check
      _
    $region7: #{tpu_custom_call.1} parent=1 // pred_check_branch
      %28 = sbr.rel (0) target = $region9
    $region8: #{tpu_custom_call.1} parent=1 // pred_region
      %s29 = sadd.s32 0, 1
      %s30 = sadd.s32 %s29, 0
      %p31 = scmp.lt.s32.totalorder %s30, 1
      %s32 = scalar_select %p31, %s30, 1
      %34 = vsyncadd [#allocation7], 0
      %s35 = smul.addr %s32, 2
      %s36 = scalar_lea.hbm %s1, %s35
      %s38 = sshll.u32 %s36, 4
      %s39 = int_to_ptr.hbm [resolvable:$true] %s38
      %s40 = sshll.u32 [#allocation6], 4
      %s41 = int_to_ptr.vmem [resolvable:$true] %s40
      %43 = dma.hbm_to_vmem [thread:$0]  %s39, 32, %s41, [#allocation7]
    $region9: #{tpu_custom_call.1} parent=1 // pred_fallthru
      _
    // Predicated region
    $region10: #{tpu_custom_call.1} parent=1 // pred_check
      _
    $region11: #{tpu_custom_call.1} parent=1 // pred_check_branch
      %45 = sbr.rel (0) target = $region13
    $region12: #{tpu_custom_call.1} parent=1 // pred_region
      %47 = dma.done [#allocation4], 32
    $region13: #{tpu_custom_call.1} parent=1 // pred_fallthru
      _
    // Predicated region
    $region14: #{tpu_custom_call.1} parent=1 // pred_check
      _
    $region15: #{tpu_custom_call.1} parent=1 // pred_check_branch
      %49 = sbr.rel (0) target = $region17
    $region16: #{tpu_custom_call.1} parent=1 // pred_region
      %51 = dma.done [#allocation7], 32
    $region17: #{tpu_custom_call.1} parent=1 // pred_fallthru
      _
    %s52 = sadd.s32 0, 1
    %s53 = sadd.s32 %s52, 0
    %p54 = scmp.lt.s32.totalorder %s53, 1
    %s55 = scalar_select %p54, %s53, 1
    %s56 = sadd.s32 0, 1
    %s57 = sadd.s32 %s56, 0
    %p58 = scmp.lt.s32.totalorder %s57, 1
    %s59 = scalar_select %p58, %s57, 1
    %p60 = scmp.eq.s32.totalorder 0, 0
    // Predicated region
    $region18: #{tpu_custom_call.1} parent=1 // pred_check
      %p61 = pneg %p60
    $region19: #{tpu_custom_call.1} parent=1 // pred_check_branch
      %63 = sbr.rel (%p61) target = $region21
    $region20: #{tpu_custom_call.1} parent=1 // pred_region
      %64 = vst [vmem:[#allocation2] sm:$0x3] 0.0
    $region21: #{tpu_custom_call.1} parent=1 // pred_fallthru
      _
    %v65 = vld [vmem:[#allocation3] sm:$0x3]
    %v66 = vld [vmem:[#allocation6] sm:$0x3]
    %v67 = vsub.f32 %v65, %v66
    %v68 = vmul.f32 %v67, %v67
    %v69 = vld [vmem:[#allocation2] sm:$0x3]
    %v70 = vadd.f32 %v69, %v68
    %71 = vst [vmem:[#allocation2] sm:$0x3] %v70
    // Predicated region
    $region22: #{tpu_custom_call.1} parent=1 // pred_check
      %p72 = pneg %p60
    $region23: #{tpu_custom_call.1} parent=1 // pred_check_branch
      %74 = sbr.rel (%p72) target = $region25
    $region24: #{tpu_custom_call.1} parent=1 // pred_region
      %v75 = vld [vmem:[#allocation2] sm:$0x3]
      %vm76 = vcmask 1041408
      %v77 = vsel %vm76, %v75, 0.0
      %78 = vadd.xlane.f32.xlu0 %v77
      %v79 = vpop.xlane.xlu0 %78
      %v80 = vrot.slane %v79, 4
      %v81 = vadd.f32 %v79, %v80
      %v82 = vrot.slane %v81, 2
      %v83 = vadd.f32 %v81, %v82
      %v84 = vrot.slane %v83, 1
      %v85 = vadd.f32 %v83, %v84
      %s86 = vtos %v85
      %v87 = vstv %s86
      %88 = vst [vmem:[#allocation8] sm:$0xff] %v87
    $region25: #{tpu_custom_call.1} parent=1 // pred_fallthru
      _
    // Predicated region
    $region26: #{tpu_custom_call.1} parent=1 // pred_check
      _
    $region27: #{tpu_custom_call.1} parent=1 // pred_check_branch
      %90 = sbr.rel (0) target = $region29
    $region28: #{tpu_custom_call.1} parent=1 // pred_region
      %92 = vsyncadd [#allocation5], 0
      %s94 = sshll.u32 [#allocation8], 4
      %s95 = int_to_ptr.vmem [resolvable:$true] %s94
      %s96 = sshll.u32 %s2, 4
      %s97 = int_to_ptr.hbm [resolvable:$true] %s96
      %99 = dma.vmem_to_hbm [thread:$0]  %s95, 128, %s97, [#allocation5]
    $region29: #{tpu_custom_call.1} parent=1 // pred_fallthru
      _
    // Predicated region
    $region30: #{tpu_custom_call.1} parent=1 // pred_check
      _
    $region31: #{tpu_custom_call.1} parent=1 // pred_check_branch
      %101 = sbr.rel (0) target = $region33
    $region32: #{tpu_custom_call.1} parent=1 // pred_region
      %103 = dma.done [#allocation5], 128
    $region33: #{tpu_custom_call.1} parent=1 // pred_fallthru
      _
    %104 = vsyncpa [#allocation4], 1
    %105 = vsyncpa [#allocation7], 1
    %106 = vsyncpa [#allocation5], 1

</llo_original>
